<compile_context>
chip_gen: v7x
topology: tpu7x:2x2x1
jax: 0.10.0
libtpu: 0.0.40
codegen_flags: <defaults>
</compile_context>

<pallas_src>
import math

import jax
import jax.numpy as jnp
from jax.experimental import pallas as pl
from jax.experimental.pallas import tpu as pltpu


def _round_up(x, m):
    return (x + m - 1) // m * m


def _pad_to(arr, rows, cols):
    pr, pc = rows - arr.shape[0], cols - arr.shape[1]
    if pr == 0 and pc == 0:
        return arr
    return jnp.pad(arr, ((0, pr), (0, pc)))


def critic_kernel(x_ref, a_ref, w1x_ref, w1a_ref, b1_ref, w2_ref, b2_ref,
                  w3_ref, b3_ref, q_ref):
    # --- layer 1: split matmul replaces cat([x, a], 1) @ W1 ------------------
    h1 = jnp.dot(x_ref[...].astype(jnp.bfloat16), w1x_ref[...],
                 preferred_element_type=jnp.float32)
    h1 = h1 + jnp.dot(a_ref[...].astype(jnp.bfloat16), w1a_ref[...],
                      preferred_element_type=jnp.float32)
    h1 = jnp.maximum(h1 + b1_ref[...], 0.0)                      # f32 epilogue

    # --- layer 2 -------------------------------------------------------------
    h2 = jnp.dot(h1.astype(jnp.bfloat16), w2_ref[...],
                 preferred_element_type=jnp.float32)
    h2 = jnp.maximum(h2 + b2_ref[...], 0.0)                      # [tm, H2p] f32

    # --- layer 3: N=1 output done as VPU multiply + lane reduce --------------
    q = jnp.sum(h2 * w3_ref[...], axis=-1, keepdims=True) + b3_ref[...]  # [tm,1]
    # Lane-dense store; wrapper slices column 0.
    q_ref[...] = jnp.broadcast_to(q, q_ref.shape)


def critic_forward(x, action, params, *, block_batch=None):
    """Full critic forward pass in one Pallas call.

    Weights stay resident in VMEM (constant index_maps); the batch is tiled
    along a 1-D parallel grid so large replay-buffer batches pipeline cleanly.
    """
    w1x, w1a, b1, w2, b2, w3, b3 = params
    batch = x.shape[0]
    s_pad, h1_pad = w1x.shape
    a_pad = w1a.shape[0]
    h2_pad = w2.shape[1]
    out_lanes = 128

    tm = block_batch or min(256, _round_up(batch, 8))
    padded_batch = _round_up(batch, tm)
    grid = (padded_batch // tm,)

    xp = _pad_to(x.astype(jnp.float32), padded_batch, s_pad)
    ap = _pad_to(action.astype(jnp.float32), padded_batch, a_pad)

    flops = 2 * padded_batch * (s_pad * h1_pad + a_pad * h1_pad
                                + h1_pad * h2_pad + h2_pad)
    bytes_accessed = sum(int(t.size) * t.dtype.itemsize
                         for t in (xp, ap, w1x, w1a, b1, w2, b2, w3, b3))
    bytes_accessed += padded_batch * out_lanes * 4

    q_full = pl.pallas_call(
        critic_kernel,
        out_shape=jax.ShapeDtypeStruct((padded_batch, out_lanes), jnp.float32),
        grid=grid,
        in_specs=[
            pl.BlockSpec((tm, s_pad), lambda i: (i, 0)),       # x tile
            pl.BlockSpec((tm, a_pad), lambda i: (i, 0)),       # action tile
            pl.BlockSpec((s_pad, h1_pad), lambda i: (0, 0)),   # W1 (state rows)
            pl.BlockSpec((a_pad, h1_pad), lambda i: (0, 0)),   # W1 (action rows)
            pl.BlockSpec((1, h1_pad), lambda i: (0, 0)),       # b1
            pl.BlockSpec((h1_pad, h2_pad), lambda i: (0, 0)),  # W2
            pl.BlockSpec((1, h2_pad), lambda i: (0, 0)),       # b2
            pl.BlockSpec((1, h2_pad), lambda i: (0, 0)),       # W3 as row vector
            pl.BlockSpec((1, 1), lambda i: (0, 0)),            # b3
        ],
        out_specs=pl.BlockSpec((tm, out_lanes), lambda i: (i, 0)),
        compiler_params=pltpu.CompilerParams(
            dimension_semantics=("parallel",)),
        cost_estimate=pl.CostEstimate(flops=flops, transcendentals=0,
                                      bytes_accessed=bytes_accessed),
    )(xp, ap, w1x, w1a, b1, w2, b2, w3, b3)

    return q_full[:batch, :1]


def init_params(key, state_dim=8, action_dim=2, hidden_dim=(400, 300)):
    """torch.nn.Linear default init U(-1/sqrt(fan_in), 1/sqrt(fan_in)),
    zero-padded to TPU-friendly shapes and weights quantized to bf16.
    Padded rows/cols and padded bias entries are exactly zero, so padded
    hidden units stay 0 through ReLU and contribute nothing downstream."""
    h1, h2 = hidden_dim
    s_pad = _round_up(state_dim, 8)
    a_pad = _round_up(action_dim, 8)
    h1_pad = _round_up(h1, 128)
    h2_pad = _round_up(h2, 128)
    in1 = state_dim + action_dim

    def uniform(k, shape, fan_in):
        bound = 1.0 / math.sqrt(fan_in)
        return jax.random.uniform(k, shape, jnp.float32, -bound, bound)

    k1w, k1b, k2w, k2b, k3w, k3b = jax.random.split(key, 6)

    # Layer 1: single torch Linear(in1, h1), split into state/action row blocks.
    w1 = uniform(k1w, (in1, h1), in1)                 # stored (in, out)
    b1 = uniform(k1b, (1, h1), in1)
    w1x = jnp.zeros((s_pad, h1_pad), jnp.float32).at[:state_dim, :h1].set(
        w1[:state_dim])
    w1a = jnp.zeros((a_pad, h1_pad), jnp.float32).at[:action_dim, :h1].set(
        w1[state_dim:])
    b1p = jnp.zeros((1, h1_pad), jnp.float32).at[:, :h1].set(b1)

    # Layer 2.
    w2 = uniform(k2w, (h1, h2), h1)
    b2 = uniform(k2b, (1, h2), h1)
    w2p = jnp.zeros((h1_pad, h2_pad), jnp.float32).at[:h1, :h2].set(w2)
    b2p = jnp.zeros((1, h2_pad), jnp.float32).at[:, :h2].set(b2)

    # Layer 3: Linear(h2, 1) kept as a row vector for the lane reduction.
    w3 = uniform(k3w, (1, h2), h2)
    b3 = uniform(k3b, (1, 1), h2)
    w3p = jnp.zeros((1, h2_pad), jnp.float32).at[:, :h2].set(w3)

    return (w1x.astype(jnp.bfloat16), w1a.astype(jnp.bfloat16), b1p,
            w2p.astype(jnp.bfloat16), b2p, w3p, b3)


def reference_forward(x, action, params):
    """Pure-JAX (XLA) reference with identical bf16-weight math."""
    w1x, w1a, b1, w2, b2, w3, b3 = params
    s_pad, a_pad = w1x.shape[0], w1a.shape[0]
    xp = _pad_to(x.astype(jnp.float32), x.shape[0], s_pad)
    ap = _pad_to(action.astype(jnp.float32), action.shape[0], a_pad)
    h1 = (jnp.dot(xp.astype(jnp.bfloat16), w1x, preferred_element_type=jnp.float32)
          + jnp.dot(ap.astype(jnp.bfloat16), w1a, preferred_element_type=jnp.float32))
    h1 = jnp.maximum(h1 + b1, 0.0)
    h2 = jnp.dot(h1.astype(jnp.bfloat16), w2, preferred_element_type=jnp.float32)
    h2 = jnp.maximum(h2 + b2, 0.0)
    return jnp.sum(h2 * w3, axis=-1, keepdims=True) + b3


if __name__ == "__main__":
    STATE_DIM, ACTION_DIM = 8, 2
    HIDDEN = (400, 300)
    BATCH = 2

    key = jax.random.PRNGKey(0)
    k_params, k_x, k_a = jax.random.split(key, 3)

    params = init_params(k_params, STATE_DIM, ACTION_DIM, HIDDEN)
    x = jax.random.normal(k_x, (BATCH, STATE_DIM), jnp.float32)
    action = jax.random.uniform(k_a, (BATCH, ACTION_DIM), jnp.float32,
                                minval=-1.0, maxval=1.0)

    q = jax.block_until_ready(critic_forward(x, action, params))
    q_ref = jax.block_until_ready(reference_forward(x, action, params))

    assert q.shape == (BATCH, 1)
    assert jnp.allclose(q, q_ref, atol=1e-3, rtol=1e-3), (q, q_ref)

    print("KERNEL_OK")
</pallas_src>

<mosaic_0001>
module attributes {stable_mosaic.version = 11 : i64} {
  func.func @critic_kernel(%arg0: i32, %arg1: memref<8x8xf32, #tpu.memory_space<vmem>>, %arg2: memref<8x8xf32, #tpu.memory_space<vmem>>, %arg3: memref<8x512xbf16, #tpu.memory_space<vmem>>, %arg4: memref<8x512xbf16, #tpu.memory_space<vmem>>, %arg5: memref<1x512xf32, #tpu.memory_space<vmem>>, %arg6: memref<512x384xbf16, #tpu.memory_space<vmem>>, %arg7: memref<1x384xf32, #tpu.memory_space<vmem>>, %arg8: memref<1x384xf32, #tpu.memory_space<vmem>>, %arg9: memref<1x1xf32, #tpu.memory_space<vmem>>, %arg10: memref<8x128xf32, #tpu.memory_space<vmem>>) attributes {dimension_semantics = [#tpu.dimension_semantics<parallel>], iteration_bounds = array<i64: 1>, scalar_prefetch = 0 : i64, scratch_operands = 0 : i64, tpu.core_type = #tpu.core_type<tc>, window_params = [{transform_indices = @transform_0, window_bounds = array<i64: 8, 8>}, {transform_indices = @transform_1, window_bounds = array<i64: 8, 8>}, {pipeline_mode = #tpu.pipeline_mode<synchronous>, transform_indices = @transform_2, window_bounds = array<i64: 8, 512>}, {pipeline_mode = #tpu.pipeline_mode<synchronous>, transform_indices = @transform_3, window_bounds = array<i64: 8, 512>}, {pipeline_mode = #tpu.pipeline_mode<synchronous>, transform_indices = @transform_4, window_bounds = array<i64: 1, 512>}, {pipeline_mode = #tpu.pipeline_mode<synchronous>, transform_indices = @transform_5, window_bounds = array<i64: 512, 384>}, {pipeline_mode = #tpu.pipeline_mode<synchronous>, transform_indices = @transform_6, window_bounds = array<i64: 1, 384>}, {pipeline_mode = #tpu.pipeline_mode<synchronous>, transform_indices = @transform_7, window_bounds = array<i64: 1, 384>}, {pipeline_mode = #tpu.pipeline_mode<synchronous>, transform_indices = @transform_8, window_bounds = array<i64: 1, 1>}, {transform_indices = @transform_9, window_bounds = array<i64: 8, 128>}]} {
    %c0 = arith.constant 0 : index
    %c0_0 = arith.constant 0 : index
    %0 = vector.load %arg1[%c0, %c0_0] : memref<8x8xf32, #tpu.memory_space<vmem>>, vector<8x8xf32>
    %1 = arith.truncf %0 : vector<8x8xf32> to vector<8x8xbf16>
    %c0_1 = arith.constant 0 : index
    %c0_2 = arith.constant 0 : index
    %2 = vector.load %arg3[%c0_1, %c0_2] : memref<8x512xbf16, #tpu.memory_space<vmem>>, vector<8x512xbf16>
    %cst = arith.constant dense<0.000000e+00> : vector<8x512xf32>
    %3 = tpu.matmul %1, %2, %cst {dimension_numbers = #tpu.dot_dimension_numbers<[1], [0], [0], [1], [0, 0, 1, 1], [], []>} : vector<8x8xbf16>, vector<8x512xbf16>, vector<8x512xf32> -> vector<8x512xf32>
    %c0_3 = arith.constant 0 : index
    %c0_4 = arith.constant 0 : index
    %4 = vector.load %arg2[%c0_3, %c0_4] : memref<8x8xf32, #tpu.memory_space<vmem>>, vector<8x8xf32>
    %5 = arith.truncf %4 : vector<8x8xf32> to vector<8x8xbf16>
    %c0_5 = arith.constant 0 : index
    %c0_6 = arith.constant 0 : index
    %6 = vector.load %arg4[%c0_5, %c0_6] : memref<8x512xbf16, #tpu.memory_space<vmem>>, vector<8x512xbf16>
    %cst_7 = arith.constant dense<0.000000e+00> : vector<8x512xf32>
    %7 = tpu.matmul %5, %6, %cst_7 {dimension_numbers = #tpu.dot_dimension_numbers<[1], [0], [0], [1], [0, 0, 1, 1], [], []>} : vector<8x8xbf16>, vector<8x512xbf16>, vector<8x512xf32> -> vector<8x512xf32>
    %8 = arith.addf %3, %7 : vector<8x512xf32>
    %c0_8 = arith.constant 0 : index
    %c0_9 = arith.constant 0 : index
    %9 = vector.load %arg5[%c0_8, %c0_9] : memref<1x512xf32, #tpu.memory_space<vmem>>, vector<1x512xf32>
    %10 = vector.broadcast %9 : vector<1x512xf32> to vector<8x512xf32>
    %11 = arith.addf %8, %10 : vector<8x512xf32>
    %cst_10 = arith.constant 0.000000e+00 : f32
    %12 = vector.broadcast %cst_10 : f32 to vector<8x512xf32>
    %13 = arith.maximumf %11, %12 : vector<8x512xf32>
    %14 = arith.truncf %13 : vector<8x512xf32> to vector<8x512xbf16>
    %c0_11 = arith.constant 0 : index
    %c0_12 = arith.constant 0 : index
    %15 = vector.load %arg6[%c0_11, %c0_12] : memref<512x384xbf16, #tpu.memory_space<vmem>>, vector<512x384xbf16>
    %cst_13 = arith.constant dense<0.000000e+00> : vector<8x384xf32>
    %16 = tpu.matmul %14, %15, %cst_13 {dimension_numbers = #tpu.dot_dimension_numbers<[1], [0], [0], [1], [0, 0, 1, 1], [], []>} : vector<8x512xbf16>, vector<512x384xbf16>, vector<8x384xf32> -> vector<8x384xf32>
    %c0_14 = arith.constant 0 : index
    %c0_15 = arith.constant 0 : index
    %17 = vector.load %arg7[%c0_14, %c0_15] : memref<1x384xf32, #tpu.memory_space<vmem>>, vector<1x384xf32>
    %18 = vector.broadcast %17 : vector<1x384xf32> to vector<8x384xf32>
    %19 = arith.addf %16, %18 : vector<8x384xf32>
    %cst_16 = arith.constant 0.000000e+00 : f32
    %20 = vector.broadcast %cst_16 : f32 to vector<8x384xf32>
    %21 = arith.maximumf %19, %20 : vector<8x384xf32>
    %c0_17 = arith.constant 0 : index
    %c0_18 = arith.constant 0 : index
    %22 = vector.load %arg8[%c0_17, %c0_18] : memref<1x384xf32, #tpu.memory_space<vmem>>, vector<1x384xf32>
    %23 = vector.broadcast %22 : vector<1x384xf32> to vector<8x384xf32>
    %24 = arith.mulf %21, %23 : vector<8x384xf32>
    %cst_19 = arith.constant dense<0.000000e+00> : vector<8xf32>
    %25 = vector.multi_reduction <add>, %24, %cst_19 [1] : vector<8x384xf32> to vector<8xf32>
    %26 = vector.shape_cast %25 : vector<8xf32> to vector<8x1xf32>
    %c0_20 = arith.constant 0 : index
    %c0_21 = arith.constant 0 : index
    %27 = vector.load %arg9[%c0_20, %c0_21] : memref<1x1xf32, #tpu.memory_space<vmem>>, vector<1x1xf32>
    %28 = vector.broadcast %27 : vector<1x1xf32> to vector<8x1xf32>
    %29 = arith.addf %26, %28 : vector<8x1xf32>
    %30 = vector.shape_cast %29 : vector<8x1xf32> to vector<8x1xf32>
    %31 = vector.broadcast %30 : vector<8x1xf32> to vector<8x128xf32>
    %c0_22 = arith.constant 0 : index
    %c0_23 = arith.constant 0 : index
    %32 = vector.load %arg10[%c0_22, %c0_23] : memref<8x128xf32, #tpu.memory_space<vmem>>, vector<8x128xf32>
    tpu.vector_store %arg10[%c0_22, %c0_23], %31 {strides = array<i32>} : memref<8x128xf32, #tpu.memory_space<vmem>>, vector<8x128xf32>,
    return
  }
  func.func @transform_0(%arg0: i32) -> (i32, i32) {
    %c0_i32 = arith.constant 0 : i32
    %c0_i32_0 = arith.constant 0 : i32
    return %arg0, %c0_i32 : i32, i32
  }
  func.func @transform_1(%arg0: i32) -> (i32, i32) {
    %c0_i32 = arith.constant 0 : i32
    %c0_i32_0 = arith.constant 0 : i32
    return %arg0, %c0_i32 : i32, i32
  }
  func.func @transform_2(%arg0: i32) -> (i32, i32) {
    %c0_i32 = arith.constant 0 : i32
    %c0_i32_0 = arith.constant 0 : i32
    %c0_i32_1 = arith.constant 0 : i32
    return %c0_i32, %c0_i32_0 : i32, i32
  }
  func.func @transform_3(%arg0: i32) -> (i32, i32) {
    %c0_i32 = arith.constant 0 : i32
    %c0_i32_0 = arith.constant 0 : i32
    %c0_i32_1 = arith.constant 0 : i32
    return %c0_i32, %c0_i32_0 : i32, i32
  }
  func.func @transform_4(%arg0: i32) -> (i32, i32) {
    %c0_i32 = arith.constant 0 : i32
    %c0_i32_0 = arith.constant 0 : i32
    %c0_i32_1 = arith.constant 0 : i32
    return %c0_i32, %c0_i32_0 : i32, i32
  }
  func.func @transform_5(%arg0: i32) -> (i32, i32) {
    %c0_i32 = arith.constant 0 : i32
    %c0_i32_0 = arith.constant 0 : i32
    %c0_i32_1 = arith.constant 0 : i32
    return %c0_i32, %c0_i32_0 : i32, i32
  }
  func.func @transform_6(%arg0: i32) -> (i32, i32) {
    %c0_i32 = arith.constant 0 : i32
    %c0_i32_0 = arith.constant 0 : i32
    %c0_i32_1 = arith.constant 0 : i32
    return %c0_i32, %c0_i32_0 : i32, i32
  }
  func.func @transform_7(%arg0: i32) -> (i32, i32) {
    %c0_i32 = arith.constant 0 : i32
    %c0_i32_0 = arith.constant 0 : i32
    %c0_i32_1 = arith.constant 0 : i32
    return %c0_i32, %c0_i32_0 : i32, i32
  }
  func.func @transform_8(%arg0: i32) -> (i32, i32) {
    %c0_i32 = arith.constant 0 : i32
    %c0_i32_0 = arith.constant 0 : i32
    %c0_i32_1 = arith.constant 0 : i32
    return %c0_i32, %c0_i32_0 : i32, i32
  }
  func.func @transform_9(%arg0: i32) -> (i32, i32) {
    %c0_i32 = arith.constant 0 : i32
    %c0_i32_0 = arith.constant 0 : i32
    return %arg0, %c0_i32 : i32, i32
  }
}

</mosaic_0001>

<llo_original>
// kernel: tpu_custom_call.1
$region0: #{tpu_custom_call.1}
  #allocation0 [shape = 'u32[]', space=smem, size = 0x4, offset = 0x4, fixed_abs, tag = 'smem constant byte address 0x4 - core index']
  #allocation1 [shape = 'u32[144,128]{1,0:T(1,128)}', space=vmem, size = 0x12000, scoped, tag = 'internal scratch']
  #allocation2 [shape = 'f32[1,1]{1,0:T(1,128)S(1)}', space=vmem, size = 0x200, scoped, tag = 'scoped memory for tpu_custom_call.1']
  %s0 = inlined_call_operand.hbm [shape: f32[8,8], index: 0, kind: input, shape index: {}]
  %s1 = inlined_call_operand.hbm [shape: f32[8,8], index: 1, kind: input, shape index: {}]
  %s2 = inlined_call_operand.hbm [shape: bf16[8,512], index: 2, kind: input, shape index: {}]
  %s3 = inlined_call_operand.hbm [shape: bf16[8,512], index: 3, kind: input, shape index: {}]
  %s4 = inlined_call_operand.vmem [shape: f32[1,512], index: 4, kind: input, shape index: {}]
  %s5 = inlined_call_operand.hbm [shape: bf16[512,384], index: 5, kind: input, shape index: {}]
  %s6 = inlined_call_operand.vmem [shape: f32[1,384], index: 6, kind: input, shape index: {}]
  %s7 = inlined_call_operand.vmem [shape: f32[1,384], index: 7, kind: input, shape index: {}]
  %s8 = inlined_call_operand.<no memory space> [shape: f32[1,1], index: 8, kind: input, shape index: {}]
  %s9 = inlined_call_operand.hbm [shape: f32[8,128], index: 9, kind: output, shape index: {}]
  %s10 = sld [smem:[#allocation0]]
  $region66: #{tpu_custom_call.1} parent=0
    _
  %s12 = ssub.s32 1, %s10
  %s13 = scalar_select 0, %s12, %s10
  %v14 = vstv %s8
  %15 = vst [vmem:[#allocation2] sm:$0x1] %v14
  $region1: #{tpu_custom_call.1} parent=0
    #allocation3 [shape = 'u8[4096]{0}', space=vmem, size = 0x1000, scoped, tag = 'input window, operand 0, single buffered']
    #allocation4 [shape = 's32[1]{0}', space=sflag, size = 0x4, scoped, tag = 'scoped memory for tpu_custom_call.1']
    #allocation5 [shape = 's32[1]{0}', space=sflag, size = 0x4, scoped, tag = 'scoped memory for tpu_custom_call.1']
    #allocation6 [shape = 'u8[4096]{0}', space=vmem, size = 0x1000, scoped, tag = 'input window, operand 1, single buffered']
    #allocation7 [shape = 's32[1]{0}', space=sflag, size = 0x4, scoped, tag = 'scoped memory for tpu_custom_call.1']
    #allocation8 [shape = 'u8[8192]{0}', space=vmem, size = 0x2000, scoped, tag = 'input window, operand 2, single buffered']
    #allocation9 [shape = 'u8[8192]{0}', space=vmem, size = 0x2000, scoped, tag = 'input window, operand 3, single buffered']
    #allocation10 [shape = 's32[1]{0}', space=sflag, size = 0x4, scoped, tag = 'scoped memory for tpu_custom_call.1']
    #allocation11 [shape = 'u8[393216]{0}', space=vmem, size = 0x60000, scoped, tag = 'input window, operand 5, single buffered']
    #allocation12 [shape = 'u8[4096]{0}', space=vmem, size = 0x1000, scoped, tag = 'output window, operand 0, single buffered']
    %16 = vsyncpa [#allocation4], 0
    %17 = vsyncpa [#allocation7], 0
    %18 = vsyncpa [#allocation10], 0
    %19 = vsyncpa [#allocation5], 0
    // Predicated region
    $region2: #{tpu_custom_call.1} parent=1 // pred_check
      _
    $region3: #{tpu_custom_call.1} parent=1 // pred_check_branch
      %21 = sbr.rel (0) target = $region5
    $region4: #{tpu_custom_call.1} parent=1 // pred_region
      %s23 = ssub.s32 128, 128
      %24 = vsyncadd [#allocation4], %s23
      %s26 = sshll.u32 [#allocation3], 4
      %s27 = int_to_ptr.vmem [resolvable:$true] %s26
      %29 = dma.hbm_to_vmem [thread:$0]  %s0, 128, %s27, [#allocation4]
    $region5: #{tpu_custom_call.1} parent=1 // pred_fallthru
      _
    // Predicated region
    $region6: #{tpu_custom_call.1} parent=1 // pred_check
      _
    $region7: #{tpu_custom_call.1} parent=1 // pred_check_branch
      %31 = sbr.rel (0) target = $region9
    $region8: #{tpu_custom_call.1} parent=1 // pred_region
      %s33 = ssub.s32 128, 128
      %34 = vsyncadd [#allocation7], %s33
      %s36 = sshll.u32 [#allocation6], 4
      %s37 = int_to_ptr.vmem [resolvable:$true] %s36
      %39 = dma.hbm_to_vmem [thread:$0]  %s1, 128, %s37, [#allocation7]
    $region9: #{tpu_custom_call.1} parent=1 // pred_fallthru
      _
    // Predicated region
    $region10: #{tpu_custom_call.1} parent=1 // pred_check
      _
    $region11: #{tpu_custom_call.1} parent=1 // pred_check_branch
      %41 = sbr.rel (0) target = $region13
    $region12: #{tpu_custom_call.1} parent=1 // pred_region
      %s43 = ssub.s32 256, 256
      %44 = vsyncadd [#allocation7], %s43
      %s46 = sshll.u32 [#allocation8], 4
      %s47 = int_to_ptr.vmem [resolvable:$true] %s46
      %49 = dma.hbm_to_vmem [thread:$0]  %s2, 256, %s47, [#allocation7]
    $region13: #{tpu_custom_call.1} parent=1 // pred_fallthru
      _
    // Predicated region
    $region14: #{tpu_custom_call.1} parent=1 // pred_check
      _
    $region15: #{tpu_custom_call.1} parent=1 // pred_check_branch
      %51 = sbr.rel (0) target = $region17
    $region16: #{tpu_custom_call.1} parent=1 // pred_region
      %s53 = ssub.s32 256, 256
      %54 = vsyncadd [#allocation10], %s53
      %s56 = sshll.u32 [#allocation9], 4
      %s57 = int_to_ptr.vmem [resolvable:$true] %s56
      %59 = dma.hbm_to_vmem [thread:$0]  %s3, 256, %s57, [#allocation10]
    $region17: #{tpu_custom_call.1} parent=1 // pred_fallthru
      _
    // Predicated region
    $region18: #{tpu_custom_call.1} parent=1 // pred_check
      _
    $region19: #{tpu_custom_call.1} parent=1 // pred_check_branch
      %61 = sbr.rel (0) target = $region21
    $region20: #{tpu_custom_call.1} parent=1 // pred_region
      _
    $region21: #{tpu_custom_call.1} parent=1 // pred_fallthru
      _
    // Predicated region
    $region22: #{tpu_custom_call.1} parent=1 // pred_check
      _
    $region23: #{tpu_custom_call.1} parent=1 // pred_check_branch
      %63 = sbr.rel (0) target = $region25
    $region24: #{tpu_custom_call.1} parent=1 // pred_region
      %s65 = ssub.s32 12288, 12288
      %66 = vsyncadd [#allocation10], %s65
      %s67 = sshll.u32 [#allocation11], 4
      %s68 = int_to_ptr.vmem [resolvable:$true] %s67
      %73 = dma.hbm_to_vmem [thread:$0]  %s5, 12288, %s68, [#allocation10], 192, 192, 12
    $region25: #{tpu_custom_call.1} parent=1 // pred_fallthru
      _
    // Predicated region
    $region26: #{tpu_custom_call.1} parent=1 // pred_check
      _
    $region27: #{tpu_custom_call.1} parent=1 // pred_check_branch
      %75 = sbr.rel (0) target = $region29
    $region28: #{tpu_custom_call.1} parent=1 // pred_region
      _
    $region29: #{tpu_custom_call.1} parent=1 // pred_fallthru
      _
    // Predicated region
    $region30: #{tpu_custom_call.1} parent=1 // pred_check
      _
    $region31: #{tpu_custom_call.1} parent=1 // pred_check_branch
      %77 = sbr.rel (0) target = $region33
    $region32: #{tpu_custom_call.1} parent=1 // pred_region
      _
    $region33: #{tpu_custom_call.1} parent=1 // pred_fallthru
      _
    // Predicated region
    $region34: #{tpu_custom_call.1} parent=1 // pred_check
      _
    $region35: #{tpu_custom_call.1} parent=1 // pred_check_branch
      %79 = sbr.rel (0) target = $region37
    $region36: #{tpu_custom_call.1} parent=1 // pred_region
      _
    $region37: #{tpu_custom_call.1} parent=1 // pred_fallthru
      _
    // Predicated region
    $region38: #{tpu_custom_call.1} parent=1 // pred_check
      _
    $region39: #{tpu_custom_call.1} parent=1 // pred_check_branch
      %81 = sbr.rel (0) target = $region41
    $region40: #{tpu_custom_call.1} parent=1 // pred_region
      %82 = dma.done [#allocation4], 128
    $region41: #{tpu_custom_call.1} parent=1 // pred_fallthru
      _
    // Predicated region
    $region42: #{tpu_custom_call.1} parent=1 // pred_check
      _
    $region43: #{tpu_custom_call.1} parent=1 // pred_check_branch
      %84 = sbr.rel (0) target = $region45
    $region44: #{tpu_custom_call.1} parent=1 // pred_region
      %85 = dma.done [#allocation7], 128
    $region45: #{tpu_custom_call.1} parent=1 // pred_fallthru
      _
    // Predicated region
    $region46: #{tpu_custom_call.1} parent=1 // pred_check
      _
    $region47: #{tpu_custom_call.1} parent=1 // pred_check_branch
      %87 = sbr.rel (0) target = $region49
    $region48: #{tpu_custom_call.1} parent=1 // pred_region
      %88 = dma.done [#allocation7], 256
    $region49: #{tpu_custom_call.1} parent=1 // pred_fallthru
      _
    // Predicated region
    $region50: #{tpu_custom_call.1} parent=1 // pred_check
      _
    $region51: #{tpu_custom_call.1} parent=1 // pred_check_branch
      %90 = sbr.rel (0) target = $region53
    $region52: #{tpu_custom_call.1} parent=1 // pred_region
      %91 = dma.done [#allocation10], 256
    $region53: #{tpu_custom_call.1} parent=1 // pred_fallthru
      _
    // Predicated region
    $region54: #{tpu_custom_call.1} parent=1 // pred_check
      _
    $region55: #{tpu_custom_call.1} parent=1 // pred_check_branch
      %93 = sbr.rel (0) target = $region57
    $region56: #{tpu_custom_call.1} parent=1 // pred_region
      %94 = dma.done [#allocation10], 12288
    $region57: #{tpu_custom_call.1} parent=1 // pred_fallthru
      _
    %v96 = vld [vmem:[#allocation3] sm:$0xff]
    %v97 = vpack.c.bf16 %v96, %v96
    %v98 = vld [vmem:[#allocation8] sm:$0xff]
    %v99 = vld [vmem:[#allocation8 + $0x8] sm:$0xff]
    %v100 = vld [vmem:[#allocation6] sm:$0xff]
    %v101 = vpack.c.bf16 %v100, %v100
    %v102 = vld [vmem:[#allocation9] sm:$0xff]
    %v103 = vld [vmem:[#allocation9 + $0x8] sm:$0xff]
    %v106 = vunpack.c.l.b16 %v102
    %v107 = vunpack.c.h.b16 %v102
    %v108 = vunpack.c.l.b16 %v103
    %v109 = vunpack.c.h.b16 %v103
    %v110 = vpack.c.b16 %v106, %v106
    %v111 = vpack.c.b16 %v107, %v107
    %v112 = vpack.c.b16 %v108, %v108
    %v113 = vpack.c.b16 %v109, %v109
    %vm114 = vcmask 64512
    %v116 = vsel %vm114, %v101, 0
    %vm118 = vcmask 1043456
    %v120 = vsel %vm118, %v110, 0
    %v123 = vsel %vm118, %v111, 0
    %v126 = vsel %vm118, %v112, 0
    %v129 = vsel %vm118, %v113, 0
    %131 = vmatprep.subr.bf16.mxu0 %v123
    %132 = vmatpush1.bf16.msra.mxu0 %v120
    %133 = vmatprep.subr.bf16.mxu0 0
    %134 = vmatpush1.bf16.msra.mxu0 0
    %135 = vmatprep.subr.bf16.mxu0 0
    %136 = vmatpush1.bf16.msra.mxu0 0
    %137 = vmatprep.subr.bf16.mxu0 0
    %138 = vmatpush1.bf16.msra.mxu0 0
    %139 = vmatprep.subr.bf16.mxu0 0
    %140 = vmatpush1.bf16.msra.mxu0 0
    %141 = vmatprep.subr.bf16.mxu0 0
    %142 = vmatpush1.bf16.msra.mxu0 0
    %143 = vmatprep.subr.bf16.mxu0 0
    %144 = vmatpush1.bf16.msra.mxu0 0
    %145 = vmatprep.subr.bf16.mxu0 0
    %146 = vmatpush1.bf16.msra.mxu0 0
    %147 = vmatprep.subr.bf16.mxu0 0
    %148 = vmatpush1.bf16.msra.mxu0 0
    %149 = vmatprep.subr.bf16.mxu0 0
    %150 = vmatpush1.bf16.msra.mxu0 0
    %151 = vmatprep.subr.bf16.mxu0 0
    %152 = vmatpush1.bf16.msra.mxu0 0
    %153 = vmatprep.subr.bf16.mxu0 0
    %154 = vmatpush1.bf16.msra.mxu0 0
    %155 = vmatprep.subr.bf16.mxu0 0
    %156 = vmatpush1.bf16.msra.mxu0 0
    %157 = vmatprep.subr.bf16.mxu0 0
    %158 = vmatpush1.bf16.msra.mxu0 0
    %159 = vmatprep.subr.bf16.mxu0 0
    %160 = vmatpush1.bf16.msra.mxu0 0
    %161 = vmatprep.subr.bf16.mxu0 0
    %162 = vmatpush1.bf16.msra.mxu0 0
    %163 = vmatprep.mubr.bf16.mxu0 0
    %164 = vmatmul.mubr.bf16.gmra.mrb[0].mxu0 %v116
    %v165 = vpop.f32.mrb[0].mxu0
    %v166 = vadd.f32 0.0, %v165
    %v167 = vpop.f32.mrb[0].mxu0
    %v168 = vadd.f32 0.0, %v167
    %v169 = vpop.f32.mrb[0].mxu0
    %v170 = vpop.f32.mrb[0].mxu0
    %171 = vdwg.mxu0
    %172 = vmatprep.subr.bf16.mxu0 %v129
    %173 = vmatpush1.bf16.msra.mxu0 %v126
    %174 = vmatprep.subr.bf16.mxu0 0
    %175 = vmatpush1.bf16.msra.mxu0 0
    %176 = vmatprep.subr.bf16.mxu0 0
    %177 = vmatpush1.bf16.msra.mxu0 0
    %178 = vmatprep.subr.bf16.mxu0 0
    %179 = vmatpush1.bf16.msra.mxu0 0
    %180 = vmatprep.subr.bf16.mxu0 0
    %181 = vmatpush1.bf16.msra.mxu0 0
    %182 = vmatprep.subr.bf16.mxu0 0
    %183 = vmatpush1.bf16.msra.mxu0 0
    %184 = vmatprep.subr.bf16.mxu0 0
    %185 = vmatpush1.bf16.msra.mxu0 0
    %186 = vmatprep.subr.bf16.mxu0 0
    %187 = vmatpush1.bf16.msra.mxu0 0
    %188 = vmatprep.subr.bf16.mxu0 0
    %189 = vmatpush1.bf16.msra.mxu0 0
    %190 = vmatprep.subr.bf16.mxu0 0
    %191 = vmatpush1.bf16.msra.mxu0 0
    %192 = vmatprep.subr.bf16.mxu0 0
    %193 = vmatpush1.bf16.msra.mxu0 0
    %194 = vmatprep.subr.bf16.mxu0 0
    %195 = vmatpush1.bf16.msra.mxu0 0
    %196 = vmatprep.subr.bf16.mxu0 0
    %197 = vmatpush1.bf16.msra.mxu0 0
    %198 = vmatprep.subr.bf16.mxu0 0
    %199 = vmatpush1.bf16.msra.mxu0 0
    %200 = vmatprep.subr.bf16.mxu0 0
    %201 = vmatpush1.bf16.msra.mxu0 0
    %202 = vmatprep.subr.bf16.mxu0 0
    %203 = vmatpush1.bf16.msra.mxu0 0
    %204 = vmatprep.mubr.bf16.mxu0 0
    %205 = vmatmul.mubr.bf16.gmra.mrb[0].mxu0 %v116
    %v206 = vpop.f32.mrb[0].mxu0
    %v207 = vadd.f32 0.0, %v206
    %v208 = vpop.f32.mrb[0].mxu0
    %v209 = vadd.f32 0.0, %v208
    %v210 = vpop.f32.mrb[0].mxu0
    %v211 = vpop.f32.mrb[0].mxu0
    %212 = vdwg.mxu0
    %v215 = vunpack.c.l.b16 %v98
    %v216 = vunpack.c.h.b16 %v98
    %v217 = vunpack.c.l.b16 %v99
    %v218 = vunpack.c.h.b16 %v99
    %v219 = vpack.c.b16 %v215, %v215
    %v220 = vpack.c.b16 %v216, %v216
    %v221 = vpack.c.b16 %v217, %v217
    %v222 = vpack.c.b16 %v218, %v218
    %v224 = vsel %vm114, %v97, 0
    %v227 = vsel %vm118, %v219, 0
    %v230 = vsel %vm118, %v220, 0
    %v233 = vsel %vm118, %v221, 0
    %v236 = vsel %vm118, %v222, 0
    %238 = vmatprep.subr.bf16.mxu0 %v230
    %239 = vmatpush1.bf16.msra.mxu0 %v227
    %240 = vmatprep.subr.bf16.mxu0 0
    %241 = vmatpush1.bf16.msra.mxu0 0
    %242 = vmatprep.subr.bf16.mxu0 0
    %243 = vmatpush1.bf16.msra.mxu0 0
    %244 = vmatprep.subr.bf16.mxu0 0
    %245 = vmatpush1.bf16.msra.mxu0 0
    %246 = vmatprep.subr.bf16.mxu0 0
    %247 = vmatpush1.bf16.msra.mxu0 0
    %248 = vmatprep.subr.bf16.mxu0 0
    %249 = vmatpush1.bf16.msra.mxu0 0
    %250 = vmatprep.subr.bf16.mxu0 0
    %251 = vmatpush1.bf16.msra.mxu0 0
    %252 = vmatprep.subr.bf16.mxu0 0
    %253 = vmatpush1.bf16.msra.mxu0 0
    %254 = vmatprep.subr.bf16.mxu0 0
    %255 = vmatpush1.bf16.msra.mxu0 0
    %256 = vmatprep.subr.bf16.mxu0 0
    %257 = vmatpush1.bf16.msra.mxu0 0
    %258 = vmatprep.subr.bf16.mxu0 0
    %259 = vmatpush1.bf16.msra.mxu0 0
    %260 = vmatprep.subr.bf16.mxu0 0
    %261 = vmatpush1.bf16.msra.mxu0 0
    %262 = vmatprep.subr.bf16.mxu0 0
    %263 = vmatpush1.bf16.msra.mxu0 0
    %264 = vmatprep.subr.bf16.mxu0 0
    %265 = vmatpush1.bf16.msra.mxu0 0
    %266 = vmatprep.subr.bf16.mxu0 0
    %267 = vmatpush1.bf16.msra.mxu0 0
    %268 = vmatprep.subr.bf16.mxu0 0
    %269 = vmatpush1.bf16.msra.mxu0 0
    %270 = vmatprep.mubr.bf16.mxu0 0
    %271 = vmatmul.mubr.bf16.gmra.mrb[0].mxu0 %v224
    %v272 = vpop.f32.mrb[0].mxu0
    %v273 = vadd.f32 %v166, %v272
    %v274 = vpop.f32.mrb[0].mxu0
    %v275 = vadd.f32 %v168, %v274
    %v276 = vpop.f32.mrb[0].mxu0
    %v277 = vpop.f32.mrb[0].mxu0
    %278 = vdwg.mxu0
    %279 = vmatprep.subr.bf16.mxu0 %v236
    %280 = vmatpush1.bf16.msra.mxu0 %v233
    %281 = vmatprep.subr.bf16.mxu0 0
    %282 = vmatpush1.bf16.msra.mxu0 0
    %283 = vmatprep.subr.bf16.mxu0 0
    %284 = vmatpush1.bf16.msra.mxu0 0
    %285 = vmatprep.subr.bf16.mxu0 0
    %286 = vmatpush1.bf16.msra.mxu0 0
    %287 = vmatprep.subr.bf16.mxu0 0
    %288 = vmatpush1.bf16.msra.mxu0 0
    %289 = vmatprep.subr.bf16.mxu0 0
    %290 = vmatpush1.bf16.msra.mxu0 0
    %291 = vmatprep.subr.bf16.mxu0 0
    %292 = vmatpush1.bf16.msra.mxu0 0
    %293 = vmatprep.subr.bf16.mxu0 0
    %294 = vmatpush1.bf16.msra.mxu0 0
    %295 = vmatprep.subr.bf16.mxu0 0
    %296 = vmatpush1.bf16.msra.mxu0 0
    %297 = vmatprep.subr.bf16.mxu0 0
    %298 = vmatpush1.bf16.msra.mxu0 0
    %299 = vmatprep.subr.bf16.mxu0 0
    %300 = vmatpush1.bf16.msra.mxu0 0
    %301 = vmatprep.subr.bf16.mxu0 0
    %302 = vmatpush1.bf16.msra.mxu0 0
    %303 = vmatprep.subr.bf16.mxu0 0
    %304 = vmatpush1.bf16.msra.mxu0 0
    %305 = vmatprep.subr.bf16.mxu0 0
    %306 = vmatpush1.bf16.msra.mxu0 0
    %307 = vmatprep.subr.bf16.mxu0 0
    %308 = vmatpush1.bf16.msra.mxu0 0
    %309 = vmatprep.subr.bf16.mxu0 0
    %310 = vmatpush1.bf16.msra.mxu0 0
    %311 = vmatprep.mubr.bf16.mxu0 0
    %312 = vmatmul.mubr.bf16.gmra.mrb[0].mxu0 %v224
    %v313 = vpop.f32.mrb[0].mxu0
    %v314 = vadd.f32 %v207, %v313
    %v315 = vpop.f32.mrb[0].mxu0
    %v316 = vadd.f32 %v209, %v315
    %v317 = vpop.f32.mrb[0].mxu0
    %v318 = vpop.f32.mrb[0].mxu0
    %319 = vdwg.mxu0
    %v320 = vld [vmem:[%s4] sm:$0xf]
    %v322 = vlaneseq
    %v323 = vshrl.u32 %v322, 7
    %v324 = vsub.s32 0, %v323
    %v325 = vrot.slane %v320, %v324
    %v326 = vlaneseq
    %v327 = vshrl.u32 %v326, 7
    %v328 = vsub.s32 1, %v327
    %v329 = vrot.slane %v320, %v328
    %v330 = vlaneseq
    %v331 = vshrl.u32 %v330, 7
    %v332 = vsub.s32 2, %v331
    %v333 = vrot.slane %v320, %v332
    %v334 = vlaneseq
    %v335 = vshrl.u32 %v334, 7
    %v336 = vsub.s32 3, %v335
    %v337 = vrot.slane %v320, %v336
    %v342 = vadd.f32 %v273, %v325
    %v343 = vadd.f32 %v275, %v329
    %v344 = vadd.f32 %v314, %v333
    %v345 = vadd.f32 %v316, %v337
    %v346 = vmax.f32 %v342, 0.0
    %v347 = vmax.f32 %v343, 0.0
    %v348 = vmax.f32 %v344, 0.0
    %v349 = vmax.f32 %v345, 0.0
    %v350 = vpack.c.bf16 %v346, %v346
    %v351 = vpack.c.bf16 %v347, %v347
    %v352 = vpack.c.bf16 %v348, %v348
    %v353 = vpack.c.bf16 %v349, %v349
    %v354 = vld [vmem:[#allocation11] sm:$0xff]
    %v355 = vld [vmem:[#allocation11 + $0x8] sm:$0xf]
    %v356 = vld [vmem:[#allocation11 + $0xc] sm:$0xff]
    %v357 = vld [vmem:[#allocation11 + $0x14] sm:$0xf]
    %v358 = vld [vmem:[#allocation11 + $0x18] sm:$0xff]
    %v359 = vld [vmem:[#allocation11 + $0x20] sm:$0xf]
    %v360 = vld [vmem:[#allocation11 + $0x24] sm:$0xff]
    %v361 = vld [vmem:[#allocation11 + $0x2c] sm:$0xf]
    %v362 = vld [vmem:[#allocation11 + $0x30] sm:$0xff]
    %v363 = vld [vmem:[#allocation11 + $0x38] sm:$0xf]
    %v364 = vld [vmem:[#allocation11 + $0x3c] sm:$0xff]
    %v365 = vld [vmem:[#allocation11 + $0x44] sm:$0xf]
    %v366 = vld [vmem:[#allocation11 + $0x48] sm:$0xff]
    %v367 = vld [vmem:[#allocation11 + $0x50] sm:$0xf]
    %v368 = vld [vmem:[#allocation11 + $0x54] sm:$0xff]
    %v369 = vld [vmem:[#allocation11 + $0x5c] sm:$0xf]
    %v370 = vld [vmem:[#allocation11 + $0x60] sm:$0xff]
    %v371 = vld [vmem:[#allocation11 + $0x68] sm:$0xf]
    %v372 = vld [vmem:[#allocation11 + $0x6c] sm:$0xff]
    %v373 = vld [vmem:[#allocation11 + $0x74] sm:$0xf]
    %v374 = vld [vmem:[#allocation11 + $0x78] sm:$0xff]
    %v375 = vld [vmem:[#allocation11 + $0x80] sm:$0xf]
    %v376 = vld [vmem:[#allocation11 + $0x84] sm:$0xff]
    %v377 = vld [vmem:[#allocation11 + $0x8c] sm:$0xf]
    %v378 = vld [vmem:[#allocation11 + $0x90] sm:$0xff]
    %v379 = vld [vmem:[#allocation11 + $0x98] sm:$0xf]
    %v380 = vld [vmem:[#allocation11 + $0x9c] sm:$0xff]
    %v381 = vld [vmem:[#allocation11 + $0xa4] sm:$0xf]
    %v382 = vld [vmem:[#allocation11 + $0xa8] sm:$0xff]
    %v383 = vld [vmem:[#allocation11 + $0xb0] sm:$0xf]
    %v384 = vld [vmem:[#allocation11 + $0xb4] sm:$0xff]
    %v385 = vld [vmem:[#allocation11 + $0xbc] sm:$0xf]
    %v386 = vld [vmem:[#allocation11 + $0xc0] sm:$0xff]
    %v387 = vld [vmem:[#allocation11 + $0xc8] sm:$0xf]
    %v388 = vld [vmem:[#allocation11 + $0xcc] sm:$0xff]
    %v389 = vld [vmem:[#allocation11 + $0xd4] sm:$0xf]
    %v390 = vld [vmem:[#allocation11 + $0xd8] sm:$0xff]
    %v391 = vld [vmem:[#allocation11 + $0xe0] sm:$0xf]
    %v392 = vld [vmem:[#allocation11 + $0xe4] sm:$0xff]
    %v393 = vld [vmem:[#allocation11 + $0xec] sm:$0xf]
    %v394 = vld [vmem:[#allocation11 + $0xf0] sm:$0xff]
    %v395 = vld [vmem:[#allocation11 + $0xf8] sm:$0xf]
    %v396 = vld [vmem:[#allocation11 + $0xfc] sm:$0xff]
    %v397 = vld [vmem:[#allocation11 + $0x104] sm:$0xf]
    %v398 = vld [vmem:[#allocation11 + $0x108] sm:$0xff]
    %v399 = vld [vmem:[#allocation11 + $0x110] sm:$0xf]
    %v400 = vld [vmem:[#allocation11 + $0x114] sm:$0xff]
    %v401 = vld [vmem:[#allocation11 + $0x11c] sm:$0xf]
    %v402 = vld [vmem:[#allocation11 + $0x120] sm:$0xff]
    %v403 = vld [vmem:[#allocation11 + $0x128] sm:$0xf]
    %v404 = vld [vmem:[#allocation11 + $0x12c] sm:$0xff]
    %v405 = vld [vmem:[#allocation11 + $0x134] sm:$0xf]
    %v406 = vld [vmem:[#allocation11 + $0x138] sm:$0xff]
    %v407 = vld [vmem:[#allocation11 + $0x140] sm:$0xf]
    %v408 = vld [vmem:[#allocation11 + $0x144] sm:$0xff]
    %v409 = vld [vmem:[#allocation11 + $0x14c] sm:$0xf]
    %v410 = vld [vmem:[#allocation11 + $0x150] sm:$0xff]
    %v411 = vld [vmem:[#allocation11 + $0x158] sm:$0xf]
    %v412 = vld [vmem:[#allocation11 + $0x15c] sm:$0xff]
    %v413 = vld [vmem:[#allocation11 + $0x164] sm:$0xf]
    %v414 = vld [vmem:[#allocation11 + $0x168] sm:$0xff]
    %v415 = vld [vmem:[#allocation11 + $0x170] sm:$0xf]
    %v416 = vld [vmem:[#allocation11 + $0x174] sm:$0xff]
    %v417 = vld [vmem:[#allocation11 + $0x17c] sm:$0xf]
    %v418 = vld [vmem:[#allocation11 + $0x180] sm:$0xff]
    %v419 = vld [vmem:[#allocation11 + $0x188] sm:$0xf]
    %v420 = vld [vmem:[#allocation11 + $0x18c] sm:$0xff]
    %v421 = vld [vmem:[#allocation11 + $0x194] sm:$0xf]
    %v422 = vld [vmem:[#allocation11 + $0x198] sm:$0xff]
    %v423 = vld [vmem:[#allocation11 + $0x1a0] sm:$0xf]
    %v424 = vld [vmem:[#allocation11 + $0x1a4] sm:$0xff]
    %v425 = vld [vmem:[#allocation11 + $0x1ac] sm:$0xf]
    %v426 = vld [vmem:[#allocation11 + $0x1b0] sm:$0xff]
    %v427 = vld [vmem:[#allocation11 + $0x1b8] sm:$0xf]
    %v428 = vld [vmem:[#allocation11 + $0x1bc] sm:$0xff]
    %v429 = vld [vmem:[#allocation11 + $0x1c4] sm:$0xf]
    %v430 = vld [vmem:[#allocation11 + $0x1c8] sm:$0xff]
    %v431 = vld [vmem:[#allocation11 + $0x1d0] sm:$0xf]
    %v432 = vld [vmem:[#allocation11 + $0x1d4] sm:$0xff]
    %v433 = vld [vmem:[#allocation11 + $0x1dc] sm:$0xf]
    %v434 = vld [vmem:[#allocation11 + $0x1e0] sm:$0xff]
    %v435 = vld [vmem:[#allocation11 + $0x1e8] sm:$0xf]
    %v436 = vld [vmem:[#allocation11 + $0x1ec] sm:$0xff]
    %v437 = vld [vmem:[#allocation11 + $0x1f4] sm:$0xf]
    %v438 = vld [vmem:[#allocation11 + $0x1f8] sm:$0xff]
    %v439 = vld [vmem:[#allocation11 + $0x200] sm:$0xf]
    %v440 = vld [vmem:[#allocation11 + $0x204] sm:$0xff]
    %v441 = vld [vmem:[#allocation11 + $0x20c] sm:$0xf]
    %v442 = vld [vmem:[#allocation11 + $0x210] sm:$0xff]
    %v443 = vld [vmem:[#allocation11 + $0x218] sm:$0xf]
    %v444 = vld [vmem:[#allocation11 + $0x21c] sm:$0xff]
    %v445 = vld [vmem:[#allocation11 + $0x224] sm:$0xf]
    %v446 = vld [vmem:[#allocation11 + $0x228] sm:$0xff]
    %v447 = vld [vmem:[#allocation11 + $0x230] sm:$0xf]
    %v448 = vld [vmem:[#allocation11 + $0x234] sm:$0xff]
    %v449 = vld [vmem:[#allocation11 + $0x23c] sm:$0xf]
    %v450 = vld [vmem:[#allocation11 + $0x240] sm:$0xff]
    %v451 = vld [vmem:[#allocation11 + $0x248] sm:$0xf]
    %v452 = vld [vmem:[#allocation11 + $0x24c] sm:$0xff]
    %v453 = vld [vmem:[#allocation11 + $0x254] sm:$0xf]
    %v454 = vld [vmem:[#allocation11 + $0x258] sm:$0xff]
    %v455 = vld [vmem:[#allocation11 + $0x260] sm:$0xf]
    %v456 = vld [vmem:[#allocation11 + $0x264] sm:$0xff]
    %v457 = vld [vmem:[#allocation11 + $0x26c] sm:$0xf]
    %v458 = vld [vmem:[#allocation11 + $0x270] sm:$0xff]
    %v459 = vld [vmem:[#allocation11 + $0x278] sm:$0xf]
    %v460 = vld [vmem:[#allocation11 + $0x27c] sm:$0xff]
    %v461 = vld [vmem:[#allocation11 + $0x284] sm:$0xf]
    %v462 = vld [vmem:[#allocation11 + $0x288] sm:$0xff]
    %v463 = vld [vmem:[#allocation11 + $0x290] sm:$0xf]
    %v464 = vld [vmem:[#allocation11 + $0x294] sm:$0xff]
    %v465 = vld [vmem:[#allocation11 + $0x29c] sm:$0xf]
    %v466 = vld [vmem:[#allocation11 + $0x2a0] sm:$0xff]
    %v467 = vld [vmem:[#allocation11 + $0x2a8] sm:$0xf]
    %v468 = vld [vmem:[#allocation11 + $0x2ac] sm:$0xff]
    %v469 = vld [vmem:[#allocation11 + $0x2b4] sm:$0xf]
    %v470 = vld [vmem:[#allocation11 + $0x2b8] sm:$0xff]
    %v471 = vld [vmem:[#allocation11 + $0x2c0] sm:$0xf]
    %v472 = vld [vmem:[#allocation11 + $0x2c4] sm:$0xff]
    %v473 = vld [vmem:[#allocation11 + $0x2cc] sm:$0xf]
    %v474 = vld [vmem:[#allocation11 + $0x2d0] sm:$0xff]
    %v475 = vld [vmem:[#allocation11 + $0x2d8] sm:$0xf]
    %v476 = vld [vmem:[#allocation11 + $0x2dc] sm:$0xff]
    %v477 = vld [vmem:[#allocation11 + $0x2e4] sm:$0xf]
    %v478 = vld [vmem:[#allocation11 + $0x2e8] sm:$0xff]
    %v479 = vld [vmem:[#allocation11 + $0x2f0] sm:$0xf]
    %v480 = vld [vmem:[#allocation11 + $0x2f4] sm:$0xff]
    %v481 = vld [vmem:[#allocation11 + $0x2fc] sm:$0xf]
    %v482 = vld [vmem:[%s6] sm:$0x7]
    %v484 = vlaneseq
    %v485 = vshrl.u32 %v484, 7
    %v486 = vsub.s32 0, %v485
    %v487 = vrot.slane %v482, %v486
    %v488 = vlaneseq
    %v489 = vshrl.u32 %v488, 7
    %v490 = vsub.s32 1, %v489
    %v491 = vrot.slane %v482, %v490
    %v492 = vlaneseq
    %v493 = vshrl.u32 %v492, 7
    %v494 = vsub.s32 2, %v493
    %v495 = vrot.slane %v482, %v494
    %v627 = vunpack.c.l.b16 %v354
    %v628 = vunpack.c.h.b16 %v354
    %v629 = vunpack.c.l.b16 %v355
    %v630 = vunpack.c.l.b16 %v356
    %v631 = vunpack.c.h.b16 %v356
    %v632 = vunpack.c.l.b16 %v357
    %v633 = vunpack.c.l.b16 %v358
    %v634 = vunpack.c.h.b16 %v358
    %v635 = vunpack.c.l.b16 %v359
    %v636 = vunpack.c.l.b16 %v360
    %v637 = vunpack.c.h.b16 %v360
    %v638 = vunpack.c.l.b16 %v361
    %v639 = vunpack.c.l.b16 %v362
    %v640 = vunpack.c.h.b16 %v362
    %v641 = vunpack.c.l.b16 %v363
    %v642 = vunpack.c.l.b16 %v364
    %v643 = vunpack.c.h.b16 %v364
    %v644 = vunpack.c.l.b16 %v365
    %v645 = vunpack.c.l.b16 %v366
    %v646 = vunpack.c.h.b16 %v366
    %v647 = vunpack.c.l.b16 %v367
    %v648 = vunpack.c.l.b16 %v368
    %v649 = vunpack.c.h.b16 %v368
    %v650 = vunpack.c.l.b16 %v369
    %v651 = vunpack.c.l.b16 %v370
    %v652 = vunpack.c.h.b16 %v370
    %v653 = vunpack.c.l.b16 %v371
    %v654 = vunpack.c.l.b16 %v372
    %v655 = vunpack.c.h.b16 %v372
    %v656 = vunpack.c.l.b16 %v373
    %v657 = vunpack.c.l.b16 %v374
    %v658 = vunpack.c.h.b16 %v374
    %v659 = vunpack.c.l.b16 %v375
    %v660 = vunpack.c.l.b16 %v376
    %v661 = vunpack.c.h.b16 %v376
    %v662 = vunpack.c.l.b16 %v377
    %v663 = vunpack.c.l.b16 %v378
    %v664 = vunpack.c.h.b16 %v378
    %v665 = vunpack.c.l.b16 %v379
    %v666 = vunpack.c.l.b16 %v380
    %v667 = vunpack.c.h.b16 %v380
    %v668 = vunpack.c.l.b16 %v381
    %v669 = vunpack.c.l.b16 %v382
    %v670 = vunpack.c.h.b16 %v382
    %v671 = vunpack.c.l.b16 %v383
    %v672 = vunpack.c.l.b16 %v384
    %v673 = vunpack.c.h.b16 %v384
    %v674 = vunpack.c.l.b16 %v385
    %v675 = vunpack.c.l.b16 %v386
    %v676 = vunpack.c.h.b16 %v386
    %v677 = vunpack.c.l.b16 %v387
    %v678 = vunpack.c.l.b16 %v388
    %v679 = vunpack.c.h.b16 %v388
    %v680 = vunpack.c.l.b16 %v389
    %v681 = vunpack.c.l.b16 %v390
    %v682 = vunpack.c.h.b16 %v390
    %v683 = vunpack.c.l.b16 %v391
    %v684 = vunpack.c.l.b16 %v392
    %v685 = vunpack.c.h.b16 %v392
    %v686 = vunpack.c.l.b16 %v393
    %v687 = vunpack.c.l.b16 %v394
    %v688 = vunpack.c.h.b16 %v394
    %v689 = vunpack.c.l.b16 %v395
    %v690 = vunpack.c.l.b16 %v396
    %v691 = vunpack.c.h.b16 %v396
    %v692 = vunpack.c.l.b16 %v397
    %v693 = vunpack.c.l.b16 %v398
    %v694 = vunpack.c.h.b16 %v398
    %v695 = vunpack.c.l.b16 %v399
    %v696 = vunpack.c.l.b16 %v400
    %v697 = vunpack.c.h.b16 %v400
    %v698 = vunpack.c.l.b16 %v401
    %v699 = vunpack.c.l.b16 %v402
    %v700 = vunpack.c.h.b16 %v402
    %v701 = vunpack.c.l.b16 %v403
    %v702 = vunpack.c.l.b16 %v404
    %v703 = vunpack.c.h.b16 %v404
    %v704 = vunpack.c.l.b16 %v405
    %v705 = vunpack.c.l.b16 %v406
    %v706 = vunpack.c.h.b16 %v406
    %v707 = vunpack.c.l.b16 %v407
    %v708 = vunpack.c.l.b16 %v408
    %v709 = vunpack.c.h.b16 %v408
    %v710 = vunpack.c.l.b16 %v409
    %v711 = vunpack.c.l.b16 %v410
    %v712 = vunpack.c.h.b16 %v410
    %v713 = vunpack.c.l.b16 %v411
    %v714 = vunpack.c.l.b16 %v412
    %v715 = vunpack.c.h.b16 %v412
    %v716 = vunpack.c.l.b16 %v413
    %v717 = vunpack.c.l.b16 %v414
    %v718 = vunpack.c.h.b16 %v414
    %v719 = vunpack.c.l.b16 %v415
    %v720 = vunpack.c.l.b16 %v416
    %v721 = vunpack.c.h.b16 %v416
    %v722 = vunpack.c.l.b16 %v417
    %v723 = vunpack.c.l.b16 %v418
    %v724 = vunpack.c.h.b16 %v418
    %v725 = vunpack.c.l.b16 %v419
    %v726 = vunpack.c.l.b16 %v420
    %v727 = vunpack.c.h.b16 %v420
    %v728 = vunpack.c.l.b16 %v421
    %v729 = vunpack.c.l.b16 %v422
    %v730 = vunpack.c.h.b16 %v422
    %v731 = vunpack.c.l.b16 %v423
    %v732 = vunpack.c.l.b16 %v424
    %v733 = vunpack.c.h.b16 %v424
    %v734 = vunpack.c.l.b16 %v425
    %v735 = vunpack.c.l.b16 %v426
    %v736 = vunpack.c.h.b16 %v426
    %v737 = vunpack.c.l.b16 %v427
    %v738 = vunpack.c.l.b16 %v428
    %v739 = vunpack.c.h.b16 %v428
    %v740 = vunpack.c.l.b16 %v429
    %v741 = vunpack.c.l.b16 %v430
    %v742 = vunpack.c.h.b16 %v430
    %v743 = vunpack.c.l.b16 %v431
    %v744 = vunpack.c.l.b16 %v432
    %v745 = vunpack.c.h.b16 %v432
    %v746 = vunpack.c.l.b16 %v433
    %v747 = vunpack.c.l.b16 %v434
    %v748 = vunpack.c.h.b16 %v434
    %v749 = vunpack.c.l.b16 %v435
    %v750 = vunpack.c.l.b16 %v436
    %v751 = vunpack.c.h.b16 %v436
    %v752 = vunpack.c.l.b16 %v437
    %v753 = vunpack.c.l.b16 %v438
    %v754 = vunpack.c.h.b16 %v438
    %v755 = vunpack.c.l.b16 %v439
    %v756 = vunpack.c.l.b16 %v440
    %v757 = vunpack.c.h.b16 %v440
    %v758 = vunpack.c.l.b16 %v441
    %v759 = vunpack.c.l.b16 %v442
    %v760 = vunpack.c.h.b16 %v442
    %v761 = vunpack.c.l.b16 %v443
    %v762 = vunpack.c.l.b16 %v444
    %v763 = vunpack.c.h.b16 %v444
    %v764 = vunpack.c.l.b16 %v445
    %v765 = vunpack.c.l.b16 %v446
    %v766 = vunpack.c.h.b16 %v446
    %v767 = vunpack.c.l.b16 %v447
    %v768 = vunpack.c.l.b16 %v448
    %v769 = vunpack.c.h.b16 %v448
    %v770 = vunpack.c.l.b16 %v449
    %v771 = vunpack.c.l.b16 %v450
    %v772 = vunpack.c.h.b16 %v450
    %v773 = vunpack.c.l.b16 %v451
    %v774 = vunpack.c.l.b16 %v452
    %v775 = vunpack.c.h.b16 %v452
    %v776 = vunpack.c.l.b16 %v453
    %v777 = vunpack.c.l.b16 %v454
    %v778 = vunpack.c.h.b16 %v454
    %v779 = vunpack.c.l.b16 %v455
    %v780 = vunpack.c.l.b16 %v456
    %v781 = vunpack.c.h.b16 %v456
    %v782 = vunpack.c.l.b16 %v457
    %v783 = vunpack.c.l.b16 %v458
    %v784 = vunpack.c.h.b16 %v458
    %v785 = vunpack.c.l.b16 %v459
    %v786 = vunpack.c.l.b16 %v460
    %v787 = vunpack.c.h.b16 %v460
    %v788 = vunpack.c.l.b16 %v461
    %v789 = vunpack.c.l.b16 %v462
    %v790 = vunpack.c.h.b16 %v462
    %v791 = vunpack.c.l.b16 %v463
    %v792 = vunpack.c.l.b16 %v464
    %v793 = vunpack.c.h.b16 %v464
    %v794 = vunpack.c.l.b16 %v465
    %v795 = vunpack.c.l.b16 %v466
    %v796 = vunpack.c.h.b16 %v466
    %v797 = vunpack.c.l.b16 %v467
    %v798 = vunpack.c.l.b16 %v468
    %v799 = vunpack.c.h.b16 %v468
    %v800 = vunpack.c.l.b16 %v469
    %v801 = vunpack.c.l.b16 %v470
    %v802 = vunpack.c.h.b16 %v470
    %v803 = vunpack.c.l.b16 %v471
    %v804 = vunpack.c.l.b16 %v472
    %v805 = vunpack.c.h.b16 %v472
    %v806 = vunpack.c.l.b16 %v473
    %v807 = vunpack.c.l.b16 %v474
    %v808 = vunpack.c.h.b16 %v474
    %v809 = vunpack.c.l.b16 %v475
    %v810 = vunpack.c.l.b16 %v476
    %v811 = vunpack.c.h.b16 %v476
    %v812 = vunpack.c.l.b16 %v477
    %v813 = vunpack.c.l.b16 %v478
    %v814 = vunpack.c.h.b16 %v478
    %v815 = vunpack.c.l.b16 %v479
    %v816 = vunpack.c.l.b16 %v480
    %v817 = vunpack.c.h.b16 %v480
    %v818 = vunpack.c.l.b16 %v481
    %v819 = vpack.c.b16 %v630, %v627
    %v820 = vpack.c.b16 %v631, %v628
    %v821 = vpack.c.b16 %v632, %v629
    %v822 = vpack.c.b16 %v636, %v633
    %v823 = vpack.c.b16 %v637, %v634
    %v824 = vpack.c.b16 %v638, %v635
    %v825 = vpack.c.b16 %v642, %v639
    %v826 = vpack.c.b16 %v643, %v640
    %v827 = vpack.c.b16 %v644, %v641
    %v828 = vpack.c.b16 %v648, %v645
    %v829 = vpack.c.b16 %v649, %v646
    %v830 = vpack.c.b16 %v650, %v647
    %v831 = vpack.c.b16 %v654, %v651
    %v832 = vpack.c.b16 %v655, %v652
    %v833 = vpack.c.b16 %v656, %v653
    %v834 = vpack.c.b16 %v660, %v657
    %v835 = vpack.c.b16 %v661, %v658
    %v836 = vpack.c.b16 %v662, %v659
    %v837 = vpack.c.b16 %v666, %v663
    %v838 = vpack.c.b16 %v667, %v664
    %v839 = vpack.c.b16 %v668, %v665
    %v840 = vpack.c.b16 %v672, %v669
    %v841 = vpack.c.b16 %v673, %v670
    %v842 = vpack.c.b16 %v674, %v671
    %v843 = vpack.c.b16 %v678, %v675
    %v844 = vpack.c.b16 %v679, %v676
    %v845 = vpack.c.b16 %v680, %v677
    %v846 = vpack.c.b16 %v684, %v681
    %v847 = vpack.c.b16 %v685, %v682
    %v848 = vpack.c.b16 %v686, %v683
    %v849 = vpack.c.b16 %v690, %v687
    %v850 = vpack.c.b16 %v691, %v688
    %v851 = vpack.c.b16 %v692, %v689
    %v852 = vpack.c.b16 %v696, %v693
    %v853 = vpack.c.b16 %v697, %v694
    %v854 = vpack.c.b16 %v698, %v695
    %v855 = vpack.c.b16 %v702, %v699
    %v856 = vpack.c.b16 %v703, %v700
    %v857 = vpack.c.b16 %v704, %v701
    %v858 = vpack.c.b16 %v708, %v705
    %v859 = vpack.c.b16 %v709, %v706
    %v860 = vpack.c.b16 %v710, %v707
    %v861 = vpack.c.b16 %v714, %v711
    %v862 = vpack.c.b16 %v715, %v712
    %v863 = vpack.c.b16 %v716, %v713
    %v864 = vpack.c.b16 %v720, %v717
    %v865 = vpack.c.b16 %v721, %v718
    %v866 = vpack.c.b16 %v722, %v719
    %v867 = vpack.c.b16 %v726, %v723
    %v868 = vpack.c.b16 %v727, %v724
    %v869 = vpack.c.b16 %v728, %v725
    %v870 = vpack.c.b16 %v732, %v729
    %v871 = vpack.c.b16 %v733, %v730
    %v872 = vpack.c.b16 %v734, %v731
    %v873 = vpack.c.b16 %v738, %v735
    %v874 = vpack.c.b16 %v739, %v736
    %v875 = vpack.c.b16 %v740, %v737
    %v876 = vpack.c.b16 %v744, %v741
    %v877 = vpack.c.b16 %v745, %v742
    %v878 = vpack.c.b16 %v746, %v743
    %v879 = vpack.c.b16 %v750, %v747
    %v880 = vpack.c.b16 %v751, %v748
    %v881 = vpack.c.b16 %v752, %v749
    %v882 = vpack.c.b16 %v756, %v753
    %v883 = vpack.c.b16 %v757, %v754
    %v884 = vpack.c.b16 %v758, %v755
    %v885 = vpack.c.b16 %v762, %v759
    %v886 = vpack.c.b16 %v763, %v760
    %v887 = vpack.c.b16 %v764, %v761
    %v888 = vpack.c.b16 %v768, %v765
    %v889 = vpack.c.b16 %v769, %v766
    %v890 = vpack.c.b16 %v770, %v767
    %v891 = vpack.c.b16 %v774, %v771
    %v892 = vpack.c.b16 %v775, %v772
    %v893 = vpack.c.b16 %v776, %v773
    %v894 = vpack.c.b16 %v780, %v777
    %v895 = vpack.c.b16 %v781, %v778
    %v896 = vpack.c.b16 %v782, %v779
    %v897 = vpack.c.b16 %v786, %v783
    %v898 = vpack.c.b16 %v787, %v784
    %v899 = vpack.c.b16 %v788, %v785
    %v900 = vpack.c.b16 %v792, %v789
    %v901 = vpack.c.b16 %v793, %v790
    %v902 = vpack.c.b16 %v794, %v791
    %v903 = vpack.c.b16 %v798, %v795
    %v904 = vpack.c.b16 %v799, %v796
    %v905 = vpack.c.b16 %v800, %v797
    %v906 = vpack.c.b16 %v804, %v801
    %v907 = vpack.c.b16 %v805, %v802
    %v908 = vpack.c.b16 %v806, %v803
    %v909 = vpack.c.b16 %v810, %v807
    %v910 = vpack.c.b16 %v811, %v808
    %v911 = vpack.c.b16 %v812, %v809
    %v912 = vpack.c.b16 %v816, %v813
    %v913 = vpack.c.b16 %v817, %v814
    %v914 = vpack.c.b16 %v818, %v815
    %1011 = vmatprep.subr.bf16.mxu0 %v820
    %1012 = vmatpush1.bf16.msra.mxu0 %v819
    %1013 = vmatprep.subr.bf16.mxu0 %v823
    %1014 = vmatpush1.bf16.msra.mxu0 %v822
    %1015 = vmatprep.subr.bf16.mxu0 %v826
    %1016 = vmatpush1.bf16.msra.mxu0 %v825
    %1017 = vmatprep.subr.bf16.mxu0 %v829
    %1018 = vmatpush1.bf16.msra.mxu0 %v828
    %1019 = vmatprep.subr.bf16.mxu0 %v832
    %1020 = vmatpush1.bf16.msra.mxu0 %v831
    %1021 = vmatprep.subr.bf16.mxu0 %v835
    %1022 = vmatpush1.bf16.msra.mxu0 %v834
    %1023 = vmatprep.subr.bf16.mxu0 %v838
    %1024 = vmatpush1.bf16.msra.mxu0 %v837
    %1025 = vmatprep.subr.bf16.mxu0 %v841
    %1026 = vmatpush1.bf16.msra.mxu0 %v840
    %1027 = vmatprep.subr.bf16.mxu0 %v844
    %1028 = vmatpush1.bf16.msra.mxu0 %v843
    %1029 = vmatprep.subr.bf16.mxu0 %v847
    %1030 = vmatpush1.bf16.msra.mxu0 %v846
    %1031 = vmatprep.subr.bf16.mxu0 %v850
    %1032 = vmatpush1.bf16.msra.mxu0 %v849
    %1033 = vmatprep.subr.bf16.mxu0 %v853
    %1034 = vmatpush1.bf16.msra.mxu0 %v852
    %1035 = vmatprep.subr.bf16.mxu0 %v856
    %1036 = vmatpush1.bf16.msra.mxu0 %v855
    %1037 = vmatprep.subr.bf16.mxu0 %v859
    %1038 = vmatpush1.bf16.msra.mxu0 %v858
    %1039 = vmatprep.subr.bf16.mxu0 %v862
    %1040 = vmatpush1.bf16.msra.mxu0 %v861
    %1041 = vmatprep.subr.bf16.mxu0 %v865
    %1042 = vmatpush1.bf16.msra.mxu0 %v864
    %1043 = vmatprep.mubr.bf16.mxu0 %v351
    %1044 = vmatmul.mubr.bf16.gmra.mrb[0].mxu0 %v350
    %v1045 = vpop.f32.mrb[0].mxu0
    %v1046 = vadd.f32 %v487, %v1045
    %v1047 = vpop.f32.mrb[0].mxu0
    %v1048 = vadd.f32 %v491, %v1047
    %v1049 = vpop.f32.mrb[0].mxu0
    %v1050 = vpop.f32.mrb[0].mxu0
    %1051 = vdwg.mxu0
    %1052 = vmatprep.subr.bf16.mxu0 %v868
    %1053 = vmatpush1.bf16.msra.mxu0 %v867
    %1054 = vmatprep.subr.bf16.mxu0 %v871
    %1055 = vmatpush1.bf16.msra.mxu0 %v870
    %1056 = vmatprep.subr.bf16.mxu0 %v874
    %1057 = vmatpush1.bf16.msra.mxu0 %v873
    %1058 = vmatprep.subr.bf16.mxu0 %v877
    %1059 = vmatpush1.bf16.msra.mxu0 %v876
    %1060 = vmatprep.subr.bf16.mxu0 %v880
    %1061 = vmatpush1.bf16.msra.mxu0 %v879
    %1062 = vmatprep.subr.bf16.mxu0 %v883
    %1063 = vmatpush1.bf16.msra.mxu0 %v882
    %1064 = vmatprep.subr.bf16.mxu0 %v886
    %1065 = vmatpush1.bf16.msra.mxu0 %v885
    %1066 = vmatprep.subr.bf16.mxu0 %v889
    %1067 = vmatpush1.bf16.msra.mxu0 %v888
    %1068 = vmatprep.subr.bf16.mxu0 %v892
    %1069 = vmatpush1.bf16.msra.mxu0 %v891
    %1070 = vmatprep.subr.bf16.mxu0 %v895
    %1071 = vmatpush1.bf16.msra.mxu0 %v894
    %1072 = vmatprep.subr.bf16.mxu0 %v898
    %1073 = vmatpush1.bf16.msra.mxu0 %v897
    %1074 = vmatprep.subr.bf16.mxu0 %v901
    %1075 = vmatpush1.bf16.msra.mxu0 %v900
    %1076 = vmatprep.subr.bf16.mxu0 %v904
    %1077 = vmatpush1.bf16.msra.mxu0 %v903
    %1078 = vmatprep.subr.bf16.mxu0 %v907
    %1079 = vmatpush1.bf16.msra.mxu0 %v906
    %1080 = vmatprep.subr.bf16.mxu0 %v910
    %1081 = vmatpush1.bf16.msra.mxu0 %v909
    %1082 = vmatprep.subr.bf16.mxu0 %v913
    %1083 = vmatpush1.bf16.msra.mxu0 %v912
    %1084 = vmatprep.mubr.bf16.mxu0 %v353
    %1085 = vmatmul.mubr.bf16.gmra.mrb[0].mxu0 %v352
    %v1086 = vpop.f32.mrb[0].mxu0
    %v1087 = vadd.f32 %v1046, %v1086
    %v1088 = vpop.f32.mrb[0].mxu0
    %v1089 = vadd.f32 %v1048, %v1088
    %v1090 = vpop.f32.mrb[0].mxu0
    %v1091 = vpop.f32.mrb[0].mxu0
    %1092 = vdwg.mxu0
    %1093 = vmatprep.subr.bf16.mxu0 0
    %1094 = vmatpush1.bf16.msra.mxu0 %v821
    %1095 = vmatprep.subr.bf16.mxu0 0
    %1096 = vmatpush1.bf16.msra.mxu0 %v824
    %1097 = vmatprep.subr.bf16.mxu0 0
    %1098 = vmatpush1.bf16.msra.mxu0 %v827
    %1099 = vmatprep.subr.bf16.mxu0 0
    %1100 = vmatpush1.bf16.msra.mxu0 %v830
    %1101 = vmatprep.subr.bf16.mxu0 0
    %1102 = vmatpush1.bf16.msra.mxu0 %v833
    %1103 = vmatprep.subr.bf16.mxu0 0
    %1104 = vmatpush1.bf16.msra.mxu0 %v836
    %1105 = vmatprep.subr.bf16.mxu0 0
    %1106 = vmatpush1.bf16.msra.mxu0 %v839
    %1107 = vmatprep.subr.bf16.mxu0 0
    %1108 = vmatpush1.bf16.msra.mxu0 %v842
    %1109 = vmatprep.subr.bf16.mxu0 0
    %1110 = vmatpush1.bf16.msra.mxu0 %v845
    %1111 = vmatprep.subr.bf16.mxu0 0
    %1112 = vmatpush1.bf16.msra.mxu0 %v848
    %1113 = vmatprep.subr.bf16.mxu0 0
    %1114 = vmatpush1.bf16.msra.mxu0 %v851
    %1115 = vmatprep.subr.bf16.mxu0 0
    %1116 = vmatpush1.bf16.msra.mxu0 %v854
    %1117 = vmatprep.subr.bf16.mxu0 0
    %1118 = vmatpush1.bf16.msra.mxu0 %v857
    %1119 = vmatprep.subr.bf16.mxu0 0
    %1120 = vmatpush1.bf16.msra.mxu0 %v860
    %1121 = vmatprep.subr.bf16.mxu0 0
    %1122 = vmatpush1.bf16.msra.mxu0 %v863
    %1123 = vmatprep.subr.bf16.mxu0 0
    %1124 = vmatpush1.bf16.msra.mxu0 %v866
    %1125 = vmatprep.mubr.bf16.mxu0 %v351
    %1126 = vmatmul.mubr.bf16.gmra.mrb[0].mxu0 %v350
    %v1127 = vpop.f32.mrb[0].mxu0
    %v1128 = vadd.f32 %v495, %v1127
    %v1129 = vpop.f32.mrb[0].mxu0
    %v1130 = vpop.f32.mrb[0].mxu0
    %v1131 = vpop.f32.mrb[0].mxu0
    %1132 = vdwg.mxu0
    %1133 = vmatprep.subr.bf16.mxu0 0
    %1134 = vmatpush1.bf16.msra.mxu0 %v869
    %1135 = vmatprep.subr.bf16.mxu0 0
    %1136 = vmatpush1.bf16.msra.mxu0 %v872
    %1137 = vmatprep.subr.bf16.mxu0 0
    %1138 = vmatpush1.bf16.msra.mxu0 %v875
    %1139 = vmatprep.subr.bf16.mxu0 0
    %1140 = vmatpush1.bf16.msra.mxu0 %v878
    %1141 = vmatprep.subr.bf16.mxu0 0
    %1142 = vmatpush1.bf16.msra.mxu0 %v881
    %1143 = vmatprep.subr.bf16.mxu0 0
    %1144 = vmatpush1.bf16.msra.mxu0 %v884
    %1145 = vmatprep.subr.bf16.mxu0 0
    %1146 = vmatpush1.bf16.msra.mxu0 %v887
    %1147 = vmatprep.subr.bf16.mxu0 0
    %1148 = vmatpush1.bf16.msra.mxu0 %v890
    %1149 = vmatprep.subr.bf16.mxu0 0
    %1150 = vmatpush1.bf16.msra.mxu0 %v893
    %1151 = vmatprep.subr.bf16.mxu0 0
    %1152 = vmatpush1.bf16.msra.mxu0 %v896
    %1153 = vmatprep.subr.bf16.mxu0 0
    %1154 = vmatpush1.bf16.msra.mxu0 %v899
    %1155 = vmatprep.subr.bf16.mxu0 0
    %1156 = vmatpush1.bf16.msra.mxu0 %v902
    %1157 = vmatprep.subr.bf16.mxu0 0
    %1158 = vmatpush1.bf16.msra.mxu0 %v905
    %1159 = vmatprep.subr.bf16.mxu0 0
    %1160 = vmatpush1.bf16.msra.mxu0 %v908
    %1161 = vmatprep.subr.bf16.mxu0 0
    %1162 = vmatpush1.bf16.msra.mxu0 %v911
    %1163 = vmatprep.subr.bf16.mxu0 0
    %1164 = vmatpush1.bf16.msra.mxu0 %v914
    %1165 = vmatprep.mubr.bf16.mxu0 %v353
    %1166 = vmatmul.mubr.bf16.gmra.mrb[0].mxu0 %v352
    %v1167 = vpop.f32.mrb[0].mxu0
    %v1168 = vadd.f32 %v1128, %v1167
    %v1169 = vpop.f32.mrb[0].mxu0
    %v1170 = vpop.f32.mrb[0].mxu0
    %v1171 = vpop.f32.mrb[0].mxu0
    %1172 = vdwg.mxu0
    %v1173 = vmax.f32 %v1087, 0.0
    %v1174 = vmax.f32 %v1089, 0.0
    %v1175 = vmax.f32 %v1168, 0.0
    %v1176 = vld [vmem:[%s7] sm:$0x7]
    %v1178 = vlaneseq
    %v1179 = vshrl.u32 %v1178, 7
    %v1180 = vsub.s32 0, %v1179
    %v1181 = vrot.slane %v1176, %v1180
    %v1182 = vlaneseq
    %v1183 = vshrl.u32 %v1182, 7
    %v1184 = vsub.s32 1, %v1183
    %v1185 = vrot.slane %v1176, %v1184
    %v1186 = vlaneseq
    %v1187 = vshrl.u32 %v1186, 7
    %v1188 = vsub.s32 2, %v1187
    %v1189 = vrot.slane %v1176, %v1188
    %v1193 = vmul.f32 %v1173, %v1181
    %v1194 = vmul.f32 %v1174, %v1185
    %v1195 = vmul.f32 %v1175, %v1189
    %v1196 = vadd.f32 %v1193, %v1194
    %v1197 = vadd.f32 %v1196, %v1195
    %1198 = vadd.xlane.f32.xlu0 %v1197
    %v1199 = vpop.xlane.xlu0 %1198
    %v1200 = vld [vmem:[#allocation2] sm:$0x1]
    %v1202 = vlaneseq
    %v1203 = vshrl.u32 %v1202, 7
    %v1204 = vsub.s32 0, %v1203
    %v1205 = vrot.slane %v1200, %v1204
    %v1207 = vadd.f32 %v1199, %v1205
    %1209 = vset.pattern.permute.xlu0 0
    %1210 = vperm.xlu0 %1209, %v1207
    %v1211 = vpop.permute.xlu0 %1210
    %1213 = vst [vmem:[#allocation12] sm:$0xff] %v1211
    // Predicated region
    $region58: #{tpu_custom_call.1} parent=1 // pred_check
      _
    $region59: #{tpu_custom_call.1} parent=1 // pred_check_branch
      %1215 = sbr.rel (0) target = $region61
    $region60: #{tpu_custom_call.1} parent=1 // pred_region
      %s1217 = ssub.s32 128, 128
      %1218 = vsyncadd [#allocation5], %s1217
      %s1220 = sshll.u32 [#allocation12], 4
      %s1221 = int_to_ptr.vmem [resolvable:$true] %s1220
      %1223 = dma.vmem_to_hbm [thread:$0]  %s1221, 128, %s9, [#allocation5]
    $region61: #{tpu_custom_call.1} parent=1 // pred_fallthru
      _
    // Predicated region
    $region62: #{tpu_custom_call.1} parent=1 // pred_check
      _
    $region63: #{tpu_custom_call.1} parent=1 // pred_check_branch
      %1225 = sbr.rel (0) target = $region65
    $region64: #{tpu_custom_call.1} parent=1 // pred_region
      %1226 = dma.done [#allocation5], 128
    $region65: #{tpu_custom_call.1} parent=1 // pred_fallthru
      _
    %1227 = vsyncpa [#allocation4], 1
    %1228 = vsyncpa [#allocation7], 1
    %1229 = vsyncpa [#allocation10], 1
    %1230 = vsyncpa [#allocation5], 1

</llo_original>
